<compile_context>
chip_gen: v6e
topology: v6e:2x2x1
jax: 0.10.0
libtpu: 0.0.40
codegen_flags: <defaults>
</compile_context>

<pallas_src>
import math

import jax
import jax.numpy as jnp
from jax.experimental import pallas as pl
from jax.experimental.pallas import tpu as pltpu


_LANES = 1024      # lane-dense last dim (multiple of 128)
_ROW_BLOCK = 256   # rows per tile -> 256*1024*4B = 1 MiB per f32 array tile


def _elementwise_kernel(x1_ref, x2_ref,
                        add_ref, sub_ref, mul_ref, div_ref, cmp_ref):
    a = x1_ref[...]
    b = x2_ref[...]
    # Cheap VALU ops, short live ranges.
    add_ref[...] = a + b
    sub_ref[...] = a - b
    mul_ref[...] = a * b
    cmp_ref[...] = (a > b).astype(cmp_ref.dtype)
    # PyTorch spec is x1 / (x2 + 1e-6); keep exact division semantics.
    eps = jnp.asarray(1e-6, dtype=a.dtype)
    div_ref[...] = a / (b + eps)


def _layout(total):
    """Pick a lane-dense (rows, lanes) layout + row tiling for `total` elems."""
    lanes = _LANES if total >= _LANES else 128
    rows = pl.cdiv(total, lanes)
    if rows <= _ROW_BLOCK:
        # Single row-block equal to the full row extent (always a legal block).
        row_block = rows
    else:
        row_block = _ROW_BLOCK
        rows = pl.cdiv(rows, _ROW_BLOCK) * _ROW_BLOCK
    padded_total = rows * lanes
    grid = rows // row_block
    return lanes, rows, row_block, grid, padded_total


def pt_module_forward(x1, x2):
    assert x1.shape == x2.shape and x1.dtype == x2.dtype
    orig_shape = x1.shape
    total = math.prod(orig_shape)

    lanes, rows, row_block, grid, padded_total = _layout(total)
    flat_shape = (rows, lanes)

    def flatten(x):
        xf = x.reshape(-1)
        if padded_total != total:
            xf = jnp.pad(xf, (0, padded_total - total))
        return xf.reshape(flat_shape)

    x1f = flatten(x1)
    x2f = flatten(x2)

    spec = pl.BlockSpec((row_block, lanes), lambda i: (i, 0))

    out_shapes = (
        jax.ShapeDtypeStruct(flat_shape, x1.dtype),   # addition
        jax.ShapeDtypeStruct(flat_shape, x1.dtype),   # subtraction
        jax.ShapeDtypeStruct(flat_shape, x1.dtype),   # multiplication
        jax.ShapeDtypeStruct(flat_shape, x1.dtype),   # division
        jax.ShapeDtypeStruct(flat_shape, jnp.bool_),  # comparison
    )

    itemsize = jnp.dtype(x1.dtype).itemsize
    # 2 inputs + 4 same-dtype outputs + 1-byte bool output per element.
    bytes_accessed = total * (6 * itemsize + 1)
    cost = pl.CostEstimate(flops=5 * total, transcendentals=0,
                           bytes_accessed=bytes_accessed)

    outs = pl.pallas_call(
        _elementwise_kernel,
        out_shape=out_shapes,
        grid=(grid,),
        in_specs=[spec, spec],
        out_specs=(spec,) * 5,
        compiler_params=pltpu.CompilerParams(
            dimension_semantics=("parallel",),
            vmem_limit_bytes=64 * 1024 * 1024,
        ),
        cost_estimate=cost,
    )(x1f, x2f)

    def unflatten(y):
        if padded_total != total:
            y = y.reshape(-1)[:total]
        return y.reshape(orig_shape)

    addition, subtraction, multiplication, division, comparison = (
        unflatten(o) for o in outs)
    return addition, subtraction, multiplication, division, comparison


if __name__ == "__main__":
    key = jax.random.PRNGKey(0)
    k1, k2 = jax.random.split(key)
    shape = (2, 4, 16, 16)  # NCHW-ish small example
    x1 = jax.random.normal(k1, shape, dtype=jnp.float32)
    x2 = jax.random.normal(k2, shape, dtype=jnp.float32)

    outs = pt_module_forward(x1, x2)
    outs = jax.block_until_ready(outs)

    # Correctness check against a plain-JAX reference (same semantics as PtModule).
    ref = (x1 + x2, x1 - x2, x1 * x2, x1 / (x2 + 1e-6), x1 > x2)
    ok = True
    for o, r in zip(outs[:4], ref[:4]):
        ok &= bool(jnp.allclose(o, r, atol=1e-5, rtol=1e-5))
    ok &= bool(outs[4].dtype == jnp.bool_)
    ok &= bool(jnp.array_equal(outs[4], ref[4]))
    assert ok, "mismatch vs reference"

    print("KERNEL_OK")
</pallas_src>

<mosaic_0001>
module attributes {stable_mosaic.version = 11 : i64} {
  func.func @_elementwise_kernel(%arg0: i32, %arg1: memref<2x1024xf32, #tpu.memory_space<vmem>>, %arg2: memref<2x1024xf32, #tpu.memory_space<vmem>>, %arg3: memref<2x1024xf32, #tpu.memory_space<vmem>>, %arg4: memref<2x1024xf32, #tpu.memory_space<vmem>>, %arg5: memref<2x1024xf32, #tpu.memory_space<vmem>>, %arg6: memref<2x1024xf32, #tpu.memory_space<vmem>>, %arg7: memref<2x1024xi32, #tpu.memory_space<vmem>>) attributes {dimension_semantics = [#tpu.dimension_semantics<parallel>], iteration_bounds = array<i64: 1>, scalar_prefetch = 0 : i64, scratch_operands = 0 : i64, tpu.core_type = #tpu.core_type<tc>, window_params = [{transform_indices = @transform_0, window_bounds = array<i64: 2, 1024>}, {transform_indices = @transform_1, window_bounds = array<i64: 2, 1024>}, {transform_indices = @transform_2, window_bounds = array<i64: 2, 1024>}, {transform_indices = @transform_3, window_bounds = array<i64: 2, 1024>}, {transform_indices = @transform_4, window_bounds = array<i64: 2, 1024>}, {transform_indices = @transform_5, window_bounds = array<i64: 2, 1024>}, {transform_indices = @transform_6, window_bounds = array<i64: 2, 1024>}]} {
    %c0 = arith.constant 0 : index
    %c0_0 = arith.constant 0 : index
    %0 = vector.load %arg1[%c0, %c0_0] : memref<2x1024xf32, #tpu.memory_space<vmem>>, vector<2x1024xf32>
    %c0_1 = arith.constant 0 : index
    %c0_2 = arith.constant 0 : index
    %1 = vector.load %arg2[%c0_1, %c0_2] : memref<2x1024xf32, #tpu.memory_space<vmem>>, vector<2x1024xf32>
    %2 = arith.addf %0, %1 : vector<2x1024xf32>
    %c0_3 = arith.constant 0 : index
    %c0_4 = arith.constant 0 : index
    %3 = vector.load %arg3[%c0_3, %c0_4] : memref<2x1024xf32, #tpu.memory_space<vmem>>, vector<2x1024xf32>
    tpu.vector_store %arg3[%c0_3, %c0_4], %2 {strides = array<i32>} : memref<2x1024xf32, #tpu.memory_space<vmem>>, vector<2x1024xf32>,
    %4 = arith.subf %0, %1 : vector<2x1024xf32>
    %c0_5 = arith.constant 0 : index
    %c0_6 = arith.constant 0 : index
    %5 = vector.load %arg4[%c0_5, %c0_6] : memref<2x1024xf32, #tpu.memory_space<vmem>>, vector<2x1024xf32>
    tpu.vector_store %arg4[%c0_5, %c0_6], %4 {strides = array<i32>} : memref<2x1024xf32, #tpu.memory_space<vmem>>, vector<2x1024xf32>,
    %6 = arith.mulf %0, %1 : vector<2x1024xf32>
    %c0_7 = arith.constant 0 : index
    %c0_8 = arith.constant 0 : index
    %7 = vector.load %arg5[%c0_7, %c0_8] : memref<2x1024xf32, #tpu.memory_space<vmem>>, vector<2x1024xf32>
    tpu.vector_store %arg5[%c0_7, %c0_8], %6 {strides = array<i32>} : memref<2x1024xf32, #tpu.memory_space<vmem>>, vector<2x1024xf32>,
    %8 = arith.cmpf ogt, %0, %1 : vector<2x1024xf32>
    %c0_9 = arith.constant 0 : index
    %c0_10 = arith.constant 0 : index
    %9 = vector.load %arg7[%c0_9, %c0_10] : memref<2x1024xi32, #tpu.memory_space<vmem>>, vector<2x1024xi32>
    %10 = arith.extui %8 : vector<2x1024xi1> to vector<2x1024xi32>
    %cst = arith.constant dense<0> : vector<2x1024xi32>
    %11 = arith.cmpi ne, %9, %cst : vector<2x1024xi32>
    tpu.vector_store %arg7[%c0_9, %c0_10], %10 {strides = array<i32>} : memref<2x1024xi32, #tpu.memory_space<vmem>>, vector<2x1024xi32>,
    %cst_11 = arith.constant 9.99999997E-7 : f32
    %12 = vector.broadcast %cst_11 : f32 to vector<2x1024xf32>
    %13 = arith.addf %1, %12 : vector<2x1024xf32>
    %14 = arith.divf %0, %13 : vector<2x1024xf32>
    %c0_12 = arith.constant 0 : index
    %c0_13 = arith.constant 0 : index
    %15 = vector.load %arg6[%c0_12, %c0_13] : memref<2x1024xf32, #tpu.memory_space<vmem>>, vector<2x1024xf32>
    tpu.vector_store %arg6[%c0_12, %c0_13], %14 {strides = array<i32>} : memref<2x1024xf32, #tpu.memory_space<vmem>>, vector<2x1024xf32>,
    return
  }
  func.func @transform_0(%arg0: i32) -> (i32, i32) {
    %c0_i32 = arith.constant 0 : i32
    %c0_i32_0 = arith.constant 0 : i32
    return %arg0, %c0_i32 : i32, i32
  }
  func.func @transform_1(%arg0: i32) -> (i32, i32) {
    %c0_i32 = arith.constant 0 : i32
    %c0_i32_0 = arith.constant 0 : i32
    return %arg0, %c0_i32 : i32, i32
  }
  func.func @transform_2(%arg0: i32) -> (i32, i32) {
    %c0_i32 = arith.constant 0 : i32
    %c0_i32_0 = arith.constant 0 : i32
    return %arg0, %c0_i32 : i32, i32
  }
  func.func @transform_3(%arg0: i32) -> (i32, i32) {
    %c0_i32 = arith.constant 0 : i32
    %c0_i32_0 = arith.constant 0 : i32
    return %arg0, %c0_i32 : i32, i32
  }
  func.func @transform_4(%arg0: i32) -> (i32, i32) {
    %c0_i32 = arith.constant 0 : i32
    %c0_i32_0 = arith.constant 0 : i32
    return %arg0, %c0_i32 : i32, i32
  }
  func.func @transform_5(%arg0: i32) -> (i32, i32) {
    %c0_i32 = arith.constant 0 : i32
    %c0_i32_0 = arith.constant 0 : i32
    return %arg0, %c0_i32 : i32, i32
  }
  func.func @transform_6(%arg0: i32) -> (i32, i32) {
    %c0_i32 = arith.constant 0 : i32
    %c0_i32_0 = arith.constant 0 : i32
    return %arg0, %c0_i32 : i32, i32
  }
}

</mosaic_0001>

<llo_original>
// kernel: tpu_custom_call.1
$region0: #{tpu_custom_call.1}
  #allocation0 [shape = 'u32[]', space=smem, size = 0x4, offset = 0x4, fixed_abs, tag = 'smem constant byte address 0x4 - core index']
  #allocation1 [shape = 'u32[144,128]{1,0:T(1,128)}', space=vmem, size = 0x12000, scoped, tag = 'internal scratch']
  %s0 = inlined_call_operand.hbm [shape: f32[2,1024], index: 0, kind: input, shape index: {}]
  %s1 = inlined_call_operand.hbm [shape: f32[2,1024], index: 1, kind: input, shape index: {}]
  %s2 = inlined_call_operand.hbm [shape: f32[2,1024], index: 2, kind: output, shape index: {0}]
  %s3 = inlined_call_operand.hbm [shape: f32[2,1024], index: 3, kind: output, shape index: {1}]
  %s4 = inlined_call_operand.hbm [shape: f32[2,1024], index: 4, kind: output, shape index: {2}]
  %s5 = inlined_call_operand.hbm [shape: f32[2,1024], index: 5, kind: output, shape index: {3}]
  %s6 = inlined_call_operand.vmem [shape: s32[2,1024], index: 6, kind: output, shape index: {4}]
  %7 = xla_tuple %s2, %s3, %s4, %s5, %s6
  %s8 = sld [smem:[#allocation0]]
  $region58: #{tpu_custom_call.1} parent=0
    _
  %s10 = ssub.s32 1, %s8
  %s11 = scalar_select 0, %s10, %s8
  $region1: #{tpu_custom_call.1} parent=0
    #allocation2 [shape = 'u8[8192]{0}', space=vmem, size = 0x2000, scoped, tag = 'input window, operand 0, single buffered']
    #allocation3 [shape = 's32[1]{0}', space=sflag, size = 0x4, scoped, tag = 'scoped memory for tpu_custom_call.1']
    #allocation4 [shape = 's32[1]{0}', space=sflag, size = 0x4, scoped, tag = 'scoped memory for tpu_custom_call.1']
    #allocation5 [shape = 'u8[8192]{0}', space=vmem, size = 0x2000, scoped, tag = 'input window, operand 1, single buffered']
    #allocation6 [shape = 's32[1]{0}', space=sflag, size = 0x4, scoped, tag = 'scoped memory for tpu_custom_call.1']
    #allocation7 [shape = 'u8[8192]{0}', space=vmem, size = 0x2000, scoped, tag = 'output window, operand 0, single buffered']
    #allocation8 [shape = 'u8[8192]{0}', space=vmem, size = 0x2000, scoped, tag = 'output window, operand 1, single buffered']
    #allocation9 [shape = 's32[1]{0}', space=sflag, size = 0x4, scoped, tag = 'scoped memory for tpu_custom_call.1']
    #allocation10 [shape = 'u8[8192]{0}', space=vmem, size = 0x2000, scoped, tag = 'output window, operand 2, single buffered']
    #allocation11 [shape = 'u8[8192]{0}', space=vmem, size = 0x2000, scoped, tag = 'output window, operand 3, single buffered']
    #allocation12 [shape = 's32[1]{0}', space=sflag, size = 0x4, scoped, tag = 'scoped memory for tpu_custom_call.1']
    %12 = vsyncpa [#allocation3], 0
    %13 = vsyncpa [#allocation6], 0
    %14 = vsyncpa [#allocation4], 0
    %15 = vsyncpa [#allocation9], 0
    %16 = vsyncpa [#allocation12], 0
    // Predicated region
    $region2: #{tpu_custom_call.1} parent=1 // pred_check
      _
    $region3: #{tpu_custom_call.1} parent=1 // pred_check_branch
      %18 = sbr.rel (0) target = $region5
    $region4: #{tpu_custom_call.1} parent=1 // pred_region
      %s20 = ssub.s32 256, 256
      %21 = vsyncadd [#allocation3], %s20
      %s23 = sshll.u32 [#allocation2], 4
      %s24 = int_to_ptr.vmem [resolvable:$true] %s23
      %26 = dma.hbm_to_vmem [thread:$0]  %s0, 256, %s24, [#allocation3]
    $region5: #{tpu_custom_call.1} parent=1 // pred_fallthru
      _
    // Predicated region
    $region6: #{tpu_custom_call.1} parent=1 // pred_check
      _
    $region7: #{tpu_custom_call.1} parent=1 // pred_check_branch
      %28 = sbr.rel (0) target = $region9
    $region8: #{tpu_custom_call.1} parent=1 // pred_region
      %s30 = ssub.s32 256, 256
      %31 = vsyncadd [#allocation6], %s30
      %s33 = sshll.u32 [#allocation5], 4
      %s34 = int_to_ptr.vmem [resolvable:$true] %s33
      %36 = dma.hbm_to_vmem [thread:$0]  %s1, 256, %s34, [#allocation6]
    $region9: #{tpu_custom_call.1} parent=1 // pred_fallthru
      _
    // Predicated region
    $region10: #{tpu_custom_call.1} parent=1 // pred_check
      _
    $region11: #{tpu_custom_call.1} parent=1 // pred_check_branch
      %38 = sbr.rel (0) target = $region13
    $region12: #{tpu_custom_call.1} parent=1 // pred_region
      %39 = dma.done [#allocation3], 256
    $region13: #{tpu_custom_call.1} parent=1 // pred_fallthru
      _
    // Predicated region
    $region14: #{tpu_custom_call.1} parent=1 // pred_check
      _
    $region15: #{tpu_custom_call.1} parent=1 // pred_check_branch
      %41 = sbr.rel (0) target = $region17
    $region16: #{tpu_custom_call.1} parent=1 // pred_region
      %42 = dma.done [#allocation6], 256
    $region17: #{tpu_custom_call.1} parent=1 // pred_fallthru
      _
    %v43 = vld [vmem:[#allocation2] sm:$0xff]
    %v44 = vld [vmem:[#allocation2 + $0x8] sm:$0xff]
    %v45 = vld [vmem:[#allocation5] sm:$0xff]
    %v46 = vld [vmem:[#allocation5 + $0x8] sm:$0xff]
    %v47 = vadd.f32 %v43, %v45
    %v48 = vadd.f32 %v44, %v46
    %49 = vst [vmem:[#allocation7] sm:$0xff] %v47
    %50 = vst [vmem:[#allocation7 + $0x8] sm:$0xff] %v48
    %v51 = vsub.f32 %v43, %v45
    %v52 = vsub.f32 %v44, %v46
    %53 = vst [vmem:[#allocation8] sm:$0xff] %v51
    %54 = vst [vmem:[#allocation8 + $0x8] sm:$0xff] %v52
    %v55 = vmul.f32 %v43, %v45
    %v56 = vmul.f32 %v44, %v46
    %57 = vst [vmem:[#allocation10] sm:$0xff] %v55
    %58 = vst [vmem:[#allocation10 + $0x8] sm:$0xff] %v56
    %vm59 = vcmp.gt.f32.partialorder %v43, %v45
    %vm60 = vcmp.gt.f32.partialorder %v44, %v46
    %v61 = vsel %vm59, 1, 0
    %v62 = vsel %vm60, 1, 0
    %63 = vst [vmem:[%s6] sm:$0xff] %v61
    %64 = vst [vmem:[%s6 + $0x8] sm:$0xff] %v62
    %v65 = vadd.f32 %v45, 1e-06
    %v66 = vadd.f32 %v46, 1e-06
    %v67 = vrcp.pop %v65
    %v68 = vmul.f32 %v43, %v67
    %v69 = vrcp.pop %v66
    %v70 = vmul.f32 %v44, %v69
    %71 = vst [vmem:[#allocation11] sm:$0xff] %v68
    %72 = vst [vmem:[#allocation11 + $0x8] sm:$0xff] %v70
    // Predicated region
    $region18: #{tpu_custom_call.1} parent=1 // pred_check
      _
    $region19: #{tpu_custom_call.1} parent=1 // pred_check_branch
      %74 = sbr.rel (0) target = $region21
    $region20: #{tpu_custom_call.1} parent=1 // pred_region
      %s76 = ssub.s32 256, 256
      %77 = vsyncadd [#allocation4], %s76
      %s79 = sshll.u32 [#allocation7], 4
      %s80 = int_to_ptr.vmem [resolvable:$true] %s79
      %82 = dma.vmem_to_hbm [thread:$0]  %s80, 256, %s2, [#allocation4]
    $region21: #{tpu_custom_call.1} parent=1 // pred_fallthru
      _
    // Predicated region
    $region22: #{tpu_custom_call.1} parent=1 // pred_check
      _
    $region23: #{tpu_custom_call.1} parent=1 // pred_check_branch
      %84 = sbr.rel (0) target = $region25
    $region24: #{tpu_custom_call.1} parent=1 // pred_region
      %s86 = ssub.s32 256, 256
      %87 = vsyncadd [#allocation9], %s86
      %s89 = sshll.u32 [#allocation8], 4
      %s90 = int_to_ptr.vmem [resolvable:$true] %s89
      %92 = dma.vmem_to_hbm [thread:$0]  %s90, 256, %s3, [#allocation9]
    $region25: #{tpu_custom_call.1} parent=1 // pred_fallthru
      _
    // Predicated region
    $region26: #{tpu_custom_call.1} parent=1 // pred_check
      _
    $region27: #{tpu_custom_call.1} parent=1 // pred_check_branch
      %94 = sbr.rel (0) target = $region29
    $region28: #{tpu_custom_call.1} parent=1 // pred_region
      %s96 = ssub.s32 256, 256
      %97 = vsyncadd [#allocation9], %s96
      %s99 = sshll.u32 [#allocation10], 4
      %s100 = int_to_ptr.vmem [resolvable:$true] %s99
      %102 = dma.vmem_to_hbm [thread:$0]  %s100, 256, %s4, [#allocation9]
    $region29: #{tpu_custom_call.1} parent=1 // pred_fallthru
      _
    // Predicated region
    $region30: #{tpu_custom_call.1} parent=1 // pred_check
      _
    $region31: #{tpu_custom_call.1} parent=1 // pred_check_branch
      %104 = sbr.rel (0) target = $region33
    $region32: #{tpu_custom_call.1} parent=1 // pred_region
      %s106 = ssub.s32 256, 256
      %107 = vsyncadd [#allocation12], %s106
      %s109 = sshll.u32 [#allocation11], 4
      %s110 = int_to_ptr.vmem [resolvable:$true] %s109
      %112 = dma.vmem_to_hbm [thread:$0]  %s110, 256, %s5, [#allocation12]
    $region33: #{tpu_custom_call.1} parent=1 // pred_fallthru
      _
    // Predicated region
    $region34: #{tpu_custom_call.1} parent=1 // pred_check
      _
    $region35: #{tpu_custom_call.1} parent=1 // pred_check_branch
      %114 = sbr.rel (0) target = $region37
    $region36: #{tpu_custom_call.1} parent=1 // pred_region
      _
    $region37: #{tpu_custom_call.1} parent=1 // pred_fallthru
      _
    // Predicated region
    $region38: #{tpu_custom_call.1} parent=1 // pred_check
      _
    $region39: #{tpu_custom_call.1} parent=1 // pred_check_branch
      %116 = sbr.rel (0) target = $region41
    $region40: #{tpu_custom_call.1} parent=1 // pred_region
      %117 = dma.done [#allocation4], 256
    $region41: #{tpu_custom_call.1} parent=1 // pred_fallthru
      _
    // Predicated region
    $region42: #{tpu_custom_call.1} parent=1 // pred_check
      _
    $region43: #{tpu_custom_call.1} parent=1 // pred_check_branch
      %119 = sbr.rel (0) target = $region45
    $region44: #{tpu_custom_call.1} parent=1 // pred_region
      %120 = dma.done [#allocation9], 256
    $region45: #{tpu_custom_call.1} parent=1 // pred_fallthru
      _
    // Predicated region
    $region46: #{tpu_custom_call.1} parent=1 // pred_check
      _
    $region47: #{tpu_custom_call.1} parent=1 // pred_check_branch
      %122 = sbr.rel (0) target = $region49
    $region48: #{tpu_custom_call.1} parent=1 // pred_region
      %123 = dma.done [#allocation9], 256
    $region49: #{tpu_custom_call.1} parent=1 // pred_fallthru
      _
    // Predicated region
    $region50: #{tpu_custom_call.1} parent=1 // pred_check
      _
    $region51: #{tpu_custom_call.1} parent=1 // pred_check_branch
      %125 = sbr.rel (0) target = $region53
    $region52: #{tpu_custom_call.1} parent=1 // pred_region
      %126 = dma.done [#allocation12], 256
    $region53: #{tpu_custom_call.1} parent=1 // pred_fallthru
      _
    // Predicated region
    $region54: #{tpu_custom_call.1} parent=1 // pred_check
      _
    $region55: #{tpu_custom_call.1} parent=1 // pred_check_branch
      %128 = sbr.rel (0) target = $region57
    $region56: #{tpu_custom_call.1} parent=1 // pred_region
      _
    $region57: #{tpu_custom_call.1} parent=1 // pred_fallthru
      _
    %129 = vsyncpa [#allocation3], 1
    %130 = vsyncpa [#allocation6], 1
    %131 = vsyncpa [#allocation4], 1
    %132 = vsyncpa [#allocation9], 1
    %133 = vsyncpa [#allocation12], 1

</llo_original>
